<compile_context>
chip_gen: v7x
topology: tpu7x:2x2x1
jax: 0.10.0
libtpu: 0.0.40
codegen_flags: <defaults>
</compile_context>

<pallas_src>
import math

import jax
import jax.numpy as jnp
from jax.experimental import pallas as pl
from jax.experimental.pallas import tpu as pltpu

HIDDEN = 128


def _round_up(x, m):
    return ((x + m - 1) // m) * m


def _choose_tm(B, tm_max):
    """Batch-tile rows: >=8 sublanes, <=tm_max, and >=2 grid steps when B > 8
    so the 'parallel' axis can feed both TensorCores on v7x."""
    two_way = _round_up(pl.cdiv(B, 2), 8)
    return max(8, min(tm_max, two_way))


# ---------------------------------------------------------------------------
# Pallas kernel: one batch tile of the fully-folded forward pass.
# ---------------------------------------------------------------------------
def bdq_kernel(x_ref, w1_ref, b1_ref, w2_ref, b2_ref, wq_ref, bq_ref, q_ref):
    # trunk: Linear(obs,128) -> ReLU -> Linear(128,128) -> ReLU
    # (trunk matmul inputs bf16; accumulation, bias-add, ReLU in f32)
    h1 = jnp.dot(x_ref[...], w1_ref[...],
                 preferred_element_type=jnp.float32) + b1_ref[...]
    h1 = jnp.maximum(h1, 0.0)
    h2 = jnp.dot(h1.astype(w2_ref.dtype), w2_ref[...],
                 preferred_element_type=jnp.float32) + b2_ref[...]
    h2 = jnp.maximum(h2, 0.0)                                        # (TM, 128) f32

    # fused dueling head (value + advs - per-head mean folded into wq/bq);
    # wq stays f32 for parity, cast to the (narrower) output dtype only at the store.
    q = jnp.dot(h2, wq_ref[...],
                preferred_element_type=jnp.float32) + bq_ref[...]    # (TM, D) f32
    q_ref[...] = q.astype(q_ref.dtype)


# ---------------------------------------------------------------------------
# One-time parameter folding / casting (plain JAX, per parameter set).
# ---------------------------------------------------------------------------
def fold_params(params, ac_dim, n, matmul_dtype=jnp.bfloat16):
    w1, b1, w2, b2, wv, bv, wa, ba = params
    D = ac_dim * n

    # block-diagonal per-head averaging matrix and its dueling projection
    avg = jnp.kron(jnp.eye(ac_dim, dtype=jnp.float32),
                   jnp.ones((n, n), dtype=jnp.float32) / float(n))
    proj = jnp.eye(D, dtype=jnp.float32) - avg                       # (D, D)
    ones_row = jnp.ones((1, D), dtype=jnp.float32)

    wq = wv @ ones_row + wa @ proj                                   # (128, D) f32
    bq = bv @ ones_row + ba @ proj                                   # (1, D)   f32

    return dict(
        w1=w1.astype(matmul_dtype), b1=b1.astype(jnp.float32),
        w2=w2.astype(matmul_dtype), b2=b2.astype(jnp.float32),
        wq=wq.astype(jnp.float32), bq=bq.astype(jnp.float32),
        D=D, matmul_dtype=matmul_dtype,
    )


# ---------------------------------------------------------------------------
# Wrapper: batch tiling + pallas_call + output slice/reshape.
# ---------------------------------------------------------------------------
def branching_q_forward(x, folded, ac_dim, n, tm=512, out_dtype=jnp.bfloat16):
    B, obs = x.shape
    D = folded["D"]

    TM = _choose_tm(B, tm)
    B_pad = _round_up(B, TM)
    num_tiles = B_pad // TM

    xp = x if B_pad == B else jnp.pad(x, ((0, B_pad - B), (0, 0)))
    xp = xp.astype(folded["matmul_dtype"])

    weight_keys = ("w1", "b1", "w2", "b2", "wq", "bq")
    flops = 2 * B_pad * (obs * HIDDEN + HIDDEN * HIDDEN + HIDDEN * D)
    bytes_accessed = (
        xp.size * xp.dtype.itemsize
        + sum(folded[k].size * folded[k].dtype.itemsize for k in weight_keys)
        + B_pad * D * jnp.dtype(out_dtype).itemsize
    )

    q_flat = pl.pallas_call(
        bdq_kernel,
        out_shape=jax.ShapeDtypeStruct((B_pad, D), out_dtype),
        grid=(num_tiles,),
        in_specs=[
            pl.BlockSpec((TM, obs), lambda i: (i, 0)),          # x tile
            pl.BlockSpec((obs, HIDDEN), lambda i: (0, 0)),      # w1 (resident)
            pl.BlockSpec((1, HIDDEN), lambda i: (0, 0)),        # b1
            pl.BlockSpec((HIDDEN, HIDDEN), lambda i: (0, 0)),   # w2
            pl.BlockSpec((1, HIDDEN), lambda i: (0, 0)),        # b2
            pl.BlockSpec((HIDDEN, D), lambda i: (0, 0)),        # fused W_q (f32)
            pl.BlockSpec((1, D), lambda i: (0, 0)),             # fused b_q (f32)
        ],
        # Only the D real columns are written back (block == full last dim),
        # in out_dtype: this is the biggest HBM-traffic saving.
        out_specs=pl.BlockSpec((TM, D), lambda i: (i, 0)),
        compiler_params=pltpu.CompilerParams(
            dimension_semantics=("parallel",)),
        cost_estimate=pl.CostEstimate(
            flops=flops, transcendentals=0, bytes_accessed=bytes_accessed),
    )(xp, folded["w1"], folded["b1"], folded["w2"], folded["b2"],
      folded["wq"], folded["bq"])

    # glue: strip batch padding and expose (B, ac_dim, n)
    return q_flat[:B].reshape(B, ac_dim, n)


# ---------------------------------------------------------------------------
# Deterministic parameter init (PyTorch-style uniform(-1/sqrt(fan_in), ...)).
# Weights stored transposed vs. PyTorch: (in_features, out_features).
# ---------------------------------------------------------------------------
def init_params(key, obs, ac_dim, n, hidden=HIDDEN):
    def linear(key, fan_in, fan_out):
        kw, kb = jax.random.split(key)
        bound = 1.0 / math.sqrt(fan_in)
        w = jax.random.uniform(kw, (fan_in, fan_out), jnp.float32, -bound, bound)
        b = jax.random.uniform(kb, (1, fan_out), jnp.float32, -bound, bound)
        return w, b

    keys = jax.random.split(key, 3 + ac_dim)
    w1, b1 = linear(keys[0], obs, hidden)
    w2, b2 = linear(keys[1], hidden, hidden)
    wv, bv = linear(keys[2], hidden, 1)

    wa_list, ba_list = [], []
    for a in range(ac_dim):
        wa_a, ba_a = linear(keys[3 + a], hidden, n)
        wa_list.append(wa_a)
        ba_list.append(ba_a)
    wa = jnp.concatenate(wa_list, axis=1)        # (hidden, ac_dim*n)
    ba = jnp.concatenate(ba_list, axis=1)        # (1, ac_dim*n)

    return (w1, b1, w2, b2, wv, bv, wa, ba)


# ---------------------------------------------------------------------------
# References for sanity checks.
# ---------------------------------------------------------------------------
def reference_forward_f32(x, params, ac_dim, n):
    """Pure-f32 mirror of the PyTorch forward."""
    w1, b1, w2, b2, wv, bv, wa, ba = params
    h = jnp.maximum(x @ w1 + b1, 0.0)
    h = jnp.maximum(h @ w2 + b2, 0.0)
    value = h @ wv + bv                                      # (B, 1)
    advs = (h @ wa + ba).reshape(x.shape[0], ac_dim, n)      # (B, ac_dim, n)
    return value[:, :, None] + advs - advs.mean(axis=2, keepdims=True)


def reference_forward_matched(x, folded, ac_dim, n):
    """Plain-JAX path using the exact same folded/cast operands as the kernel
    (f32 output; the kernel additionally rounds its store to out_dtype)."""
    mdt = folded["matmul_dtype"]
    h = jnp.dot(x.astype(mdt), folded["w1"],
                preferred_element_type=jnp.float32) + folded["b1"]
    h = jnp.maximum(h, 0.0)
    h = jnp.dot(h.astype(mdt), folded["w2"],
                preferred_element_type=jnp.float32) + folded["b2"]
    h = jnp.maximum(h, 0.0)
    q = jnp.dot(h, folded["wq"],
                preferred_element_type=jnp.float32) + folded["bq"]
    return q.reshape(x.shape[0], ac_dim, n)


if __name__ == "__main__":
    B, OBS, AC_DIM, N = 2, 32, 4, 8

    key = jax.random.PRNGKey(0)
    kx, kp = jax.random.split(key)
    x = jax.random.normal(kx, (B, OBS), dtype=jnp.float32)
    params = init_params(kp, OBS, AC_DIM, N)
    folded = fold_params(params, AC_DIM, N)

    q = branching_q_forward(x, folded, AC_DIM, N)
    q = jax.block_until_ready(q)

    assert q.shape == (B, AC_DIM, N)
    qf = q.astype(jnp.float32)

    # tight check vs. a reference using identical folded operands
    # (difference = MXU vs XLA rounding + final bf16 output cast)
    q_match = reference_forward_matched(x, folded, AC_DIM, N)
    assert jnp.allclose(qf, q_match, atol=2e-2, rtol=2e-2), "mismatch vs matched ref"

    # loose check vs. the pure-f32 PyTorch-style reference (bf16 trunk + bf16 output)
    q_f32 = reference_forward_f32(x, params, AC_DIM, N)
    assert jnp.allclose(qf, q_f32, atol=6e-2, rtol=6e-2), "mismatch vs f32 ref"

    print("KERNEL_OK")
</pallas_src>

<mosaic_0001>
module attributes {stable_mosaic.version = 11 : i64} {
  func.func @bdq_kernel(%arg0: i32, %arg1: memref<8x32xbf16, #tpu.memory_space<vmem>>, %arg2: memref<32x128xbf16, #tpu.memory_space<vmem>>, %arg3: memref<1x128xf32, #tpu.memory_space<vmem>>, %arg4: memref<128x128xbf16, #tpu.memory_space<vmem>>, %arg5: memref<1x128xf32, #tpu.memory_space<vmem>>, %arg6: memref<128x32xf32, #tpu.memory_space<vmem>>, %arg7: memref<1x32xf32, #tpu.memory_space<vmem>>, %arg8: memref<8x32xbf16, #tpu.memory_space<vmem>>) attributes {dimension_semantics = [#tpu.dimension_semantics<parallel>], iteration_bounds = array<i64: 1>, scalar_prefetch = 0 : i64, scratch_operands = 0 : i64, tpu.core_type = #tpu.core_type<tc>, window_params = [{transform_indices = @transform_0, window_bounds = array<i64: 8, 32>}, {pipeline_mode = #tpu.pipeline_mode<synchronous>, transform_indices = @transform_1, window_bounds = array<i64: 32, 128>}, {pipeline_mode = #tpu.pipeline_mode<synchronous>, transform_indices = @transform_2, window_bounds = array<i64: 1, 128>}, {pipeline_mode = #tpu.pipeline_mode<synchronous>, transform_indices = @transform_3, window_bounds = array<i64: 128, 128>}, {pipeline_mode = #tpu.pipeline_mode<synchronous>, transform_indices = @transform_4, window_bounds = array<i64: 1, 128>}, {pipeline_mode = #tpu.pipeline_mode<synchronous>, transform_indices = @transform_5, window_bounds = array<i64: 128, 32>}, {pipeline_mode = #tpu.pipeline_mode<synchronous>, transform_indices = @transform_6, window_bounds = array<i64: 1, 32>}, {transform_indices = @transform_7, window_bounds = array<i64: 8, 32>}]} {
    %c0 = arith.constant 0 : index
    %c0_0 = arith.constant 0 : index
    %0 = vector.load %arg1[%c0, %c0_0] : memref<8x32xbf16, #tpu.memory_space<vmem>>, vector<8x32xbf16>
    %c0_1 = arith.constant 0 : index
    %c0_2 = arith.constant 0 : index
    %1 = vector.load %arg2[%c0_1, %c0_2] : memref<32x128xbf16, #tpu.memory_space<vmem>>, vector<32x128xbf16>
    %cst = arith.constant dense<0.000000e+00> : vector<8x128xf32>
    %2 = tpu.matmul %0, %1, %cst {dimension_numbers = #tpu.dot_dimension_numbers<[1], [0], [0], [1], [0, 0, 1, 1], [], []>} : vector<8x32xbf16>, vector<32x128xbf16>, vector<8x128xf32> -> vector<8x128xf32>
    %c0_3 = arith.constant 0 : index
    %c0_4 = arith.constant 0 : index
    %3 = vector.load %arg3[%c0_3, %c0_4] : memref<1x128xf32, #tpu.memory_space<vmem>>, vector<1x128xf32>
    %4 = vector.broadcast %3 : vector<1x128xf32> to vector<8x128xf32>
    %5 = arith.addf %2, %4 : vector<8x128xf32>
    %cst_5 = arith.constant 0.000000e+00 : f32
    %6 = vector.broadcast %cst_5 : f32 to vector<8x128xf32>
    %7 = arith.maximumf %5, %6 : vector<8x128xf32>
    %8 = arith.truncf %7 : vector<8x128xf32> to vector<8x128xbf16>
    %c0_6 = arith.constant 0 : index
    %c0_7 = arith.constant 0 : index
    %9 = vector.load %arg4[%c0_6, %c0_7] : memref<128x128xbf16, #tpu.memory_space<vmem>>, vector<128x128xbf16>
    %cst_8 = arith.constant dense<0.000000e+00> : vector<8x128xf32>
    %10 = tpu.matmul %8, %9, %cst_8 {dimension_numbers = #tpu.dot_dimension_numbers<[1], [0], [0], [1], [0, 0, 1, 1], [], []>} : vector<8x128xbf16>, vector<128x128xbf16>, vector<8x128xf32> -> vector<8x128xf32>
    %c0_9 = arith.constant 0 : index
    %c0_10 = arith.constant 0 : index
    %11 = vector.load %arg5[%c0_9, %c0_10] : memref<1x128xf32, #tpu.memory_space<vmem>>, vector<1x128xf32>
    %12 = vector.broadcast %11 : vector<1x128xf32> to vector<8x128xf32>
    %13 = arith.addf %10, %12 : vector<8x128xf32>
    %cst_11 = arith.constant 0.000000e+00 : f32
    %14 = vector.broadcast %cst_11 : f32 to vector<8x128xf32>
    %15 = arith.maximumf %13, %14 : vector<8x128xf32>
    %c0_12 = arith.constant 0 : index
    %c0_13 = arith.constant 0 : index
    %16 = vector.load %arg6[%c0_12, %c0_13] : memref<128x32xf32, #tpu.memory_space<vmem>>, vector<128x32xf32>
    %cst_14 = arith.constant dense<0.000000e+00> : vector<8x32xf32>
    %17 = tpu.matmul %15, %16, %cst_14 {dimension_numbers = #tpu.dot_dimension_numbers<[1], [0], [0], [1], [0, 0, 1, 1], [], []>} : vector<8x128xf32>, vector<128x32xf32>, vector<8x32xf32> -> vector<8x32xf32>
    %c0_15 = arith.constant 0 : index
    %c0_16 = arith.constant 0 : index
    %18 = vector.load %arg7[%c0_15, %c0_16] : memref<1x32xf32, #tpu.memory_space<vmem>>, vector<1x32xf32>
    %19 = vector.broadcast %18 : vector<1x32xf32> to vector<8x32xf32>
    %20 = arith.addf %17, %19 : vector<8x32xf32>
    %21 = arith.truncf %20 : vector<8x32xf32> to vector<8x32xbf16>
    %c0_17 = arith.constant 0 : index
    %c0_18 = arith.constant 0 : index
    %22 = vector.load %arg8[%c0_17, %c0_18] : memref<8x32xbf16, #tpu.memory_space<vmem>>, vector<8x32xbf16>
    tpu.vector_store %arg8[%c0_17, %c0_18], %21 {strides = array<i32>} : memref<8x32xbf16, #tpu.memory_space<vmem>>, vector<8x32xbf16>,
    return
  }
  func.func @transform_0(%arg0: i32) -> (i32, i32) {
    %c0_i32 = arith.constant 0 : i32
    %c0_i32_0 = arith.constant 0 : i32
    return %arg0, %c0_i32 : i32, i32
  }
  func.func @transform_1(%arg0: i32) -> (i32, i32) {
    %c0_i32 = arith.constant 0 : i32
    %c0_i32_0 = arith.constant 0 : i32
    %c0_i32_1 = arith.constant 0 : i32
    return %c0_i32, %c0_i32_0 : i32, i32
  }
  func.func @transform_2(%arg0: i32) -> (i32, i32) {
    %c0_i32 = arith.constant 0 : i32
    %c0_i32_0 = arith.constant 0 : i32
    %c0_i32_1 = arith.constant 0 : i32
    return %c0_i32, %c0_i32_0 : i32, i32
  }
  func.func @transform_3(%arg0: i32) -> (i32, i32) {
    %c0_i32 = arith.constant 0 : i32
    %c0_i32_0 = arith.constant 0 : i32
    %c0_i32_1 = arith.constant 0 : i32
    return %c0_i32, %c0_i32_0 : i32, i32
  }
  func.func @transform_4(%arg0: i32) -> (i32, i32) {
    %c0_i32 = arith.constant 0 : i32
    %c0_i32_0 = arith.constant 0 : i32
    %c0_i32_1 = arith.constant 0 : i32
    return %c0_i32, %c0_i32_0 : i32, i32
  }
  func.func @transform_5(%arg0: i32) -> (i32, i32) {
    %c0_i32 = arith.constant 0 : i32
    %c0_i32_0 = arith.constant 0 : i32
    %c0_i32_1 = arith.constant 0 : i32
    return %c0_i32, %c0_i32_0 : i32, i32
  }
  func.func @transform_6(%arg0: i32) -> (i32, i32) {
    %c0_i32 = arith.constant 0 : i32
    %c0_i32_0 = arith.constant 0 : i32
    %c0_i32_1 = arith.constant 0 : i32
    return %c0_i32, %c0_i32_0 : i32, i32
  }
  func.func @transform_7(%arg0: i32) -> (i32, i32) {
    %c0_i32 = arith.constant 0 : i32
    %c0_i32_0 = arith.constant 0 : i32
    return %arg0, %c0_i32 : i32, i32
  }
}

</mosaic_0001>

<llo_original>
// kernel: tpu_custom_call.1
$region0: #{tpu_custom_call.1}
  #allocation0 [shape = 'u32[]', space=smem, size = 0x4, offset = 0x4, fixed_abs, tag = 'smem constant byte address 0x4 - core index']
  #allocation1 [shape = 'u32[144,128]{1,0:T(1,128)}', space=vmem, size = 0x12000, scoped, tag = 'internal scratch']
  %s0 = inlined_call_operand.vmem [shape: bf16[8,32], index: 0, kind: input, shape index: {}]
  %s1 = inlined_call_operand.vmem [shape: bf16[32,128], index: 1, kind: input, shape index: {}]
  %s2 = inlined_call_operand.vmem [shape: f32[1,128], index: 2, kind: input, shape index: {}]
  %s3 = inlined_call_operand.vmem [shape: bf16[128,128], index: 3, kind: input, shape index: {}]
  %s4 = inlined_call_operand.vmem [shape: f32[1,128], index: 4, kind: input, shape index: {}]
  %s5 = inlined_call_operand.vmem [shape: f32[128,32], index: 5, kind: input, shape index: {}]
  %s6 = inlined_call_operand.vmem [shape: f32[1,32], index: 6, kind: input, shape index: {}]
  %s7 = inlined_call_operand.hbm [shape: bf16[8,32], index: 7, kind: output, shape index: {}]
  %s8 = sld [smem:[#allocation0]]
  $region38: #{tpu_custom_call.1} parent=0
    _
  %s10 = ssub.s32 1, %s8
  %s11 = scalar_select 0, %s10, %s8
  $region1: #{tpu_custom_call.1} parent=0
    #allocation2 [shape = 'u8[2048]{0}', space=vmem, size = 0x800, scoped, tag = 'output window, operand 0, single buffered']
    #allocation3 [shape = 's32[1]{0}', space=sflag, size = 0x4, scoped, tag = 'scoped memory for tpu_custom_call.1']
    %12 = vsyncpa [#allocation3], 0
    // Predicated region
    $region2: #{tpu_custom_call.1} parent=1 // pred_check
      _
    $region3: #{tpu_custom_call.1} parent=1 // pred_check_branch
      %14 = sbr.rel (0) target = $region5
    $region4: #{tpu_custom_call.1} parent=1 // pred_region
      _
    $region5: #{tpu_custom_call.1} parent=1 // pred_fallthru
      _
    // Predicated region
    $region6: #{tpu_custom_call.1} parent=1 // pred_check
      _
    $region7: #{tpu_custom_call.1} parent=1 // pred_check_branch
      %16 = sbr.rel (0) target = $region9
    $region8: #{tpu_custom_call.1} parent=1 // pred_region
      _
    $region9: #{tpu_custom_call.1} parent=1 // pred_fallthru
      _
    // Predicated region
    $region10: #{tpu_custom_call.1} parent=1 // pred_check
      _
    $region11: #{tpu_custom_call.1} parent=1 // pred_check_branch
      %18 = sbr.rel (0) target = $region13
    $region12: #{tpu_custom_call.1} parent=1 // pred_region
      _
    $region13: #{tpu_custom_call.1} parent=1 // pred_fallthru
      _
    // Predicated region
    $region14: #{tpu_custom_call.1} parent=1 // pred_check
      _
    $region15: #{tpu_custom_call.1} parent=1 // pred_check_branch
      %20 = sbr.rel (0) target = $region17
    $region16: #{tpu_custom_call.1} parent=1 // pred_region
      _
    $region17: #{tpu_custom_call.1} parent=1 // pred_fallthru
      _
    // Predicated region
    $region18: #{tpu_custom_call.1} parent=1 // pred_check
      _
    $region19: #{tpu_custom_call.1} parent=1 // pred_check_branch
      %22 = sbr.rel (0) target = $region21
    $region20: #{tpu_custom_call.1} parent=1 // pred_region
      _
    $region21: #{tpu_custom_call.1} parent=1 // pred_fallthru
      _
    // Predicated region
    $region22: #{tpu_custom_call.1} parent=1 // pred_check
      _
    $region23: #{tpu_custom_call.1} parent=1 // pred_check_branch
      %24 = sbr.rel (0) target = $region25
    $region24: #{tpu_custom_call.1} parent=1 // pred_region
      _
    $region25: #{tpu_custom_call.1} parent=1 // pred_fallthru
      _
    // Predicated region
    $region26: #{tpu_custom_call.1} parent=1 // pred_check
      _
    $region27: #{tpu_custom_call.1} parent=1 // pred_check_branch
      %26 = sbr.rel (0) target = $region29
    $region28: #{tpu_custom_call.1} parent=1 // pred_region
      _
    $region29: #{tpu_custom_call.1} parent=1 // pred_fallthru
      _
    %v28 = vld [vmem:[%s0] sm:$0xf]
    %v29 = vld [vmem:[%s1] sm:$0xf]
    %v30 = vld [vmem:[%s1 + $0x4] sm:$0xf]
    %v31 = vld [vmem:[%s1 + $0x8] sm:$0xf]
    %v32 = vld [vmem:[%s1 + $0xc] sm:$0xf]
    %v33 = vld [vmem:[%s2] sm:$0x1]
    %v35 = vlaneseq
    %v36 = vshrl.u32 %v35, 7
    %v37 = vsub.s32 0, %v36
    %v38 = vrot.slane %v33, %v37
    %v44 = vunpack.c.l.b16 %v29
    %v45 = vunpack.c.l.b16 %v30
    %v46 = vunpack.c.l.b16 %v31
    %v47 = vunpack.c.l.b16 %v32
    %v48 = vpack.c.b16 %v45, %v44
    %v49 = vpack.c.b16 %v47, %v46
    %vm52 = vcmask 261120
    %v54 = vsel %vm52, %v28, 0
    %56 = vmatprep.subr.bf16.mxu0 0
    %57 = vmatpush1.bf16.msra.mxu0 %v48
    %58 = vmatprep.subr.bf16.mxu0 0
    %59 = vmatpush1.bf16.msra.mxu0 %v49
    %60 = vmatprep.subr.bf16.mxu0 0
    %61 = vmatpush1.bf16.msra.mxu0 0
    %62 = vmatprep.subr.bf16.mxu0 0
    %63 = vmatpush1.bf16.msra.mxu0 0
    %64 = vmatprep.subr.bf16.mxu0 0
    %65 = vmatpush1.bf16.msra.mxu0 0
    %66 = vmatprep.subr.bf16.mxu0 0
    %67 = vmatpush1.bf16.msra.mxu0 0
    %68 = vmatprep.subr.bf16.mxu0 0
    %69 = vmatpush1.bf16.msra.mxu0 0
    %70 = vmatprep.subr.bf16.mxu0 0
    %71 = vmatpush1.bf16.msra.mxu0 0
    %72 = vmatprep.subr.bf16.mxu0 0
    %73 = vmatpush1.bf16.msra.mxu0 0
    %74 = vmatprep.subr.bf16.mxu0 0
    %75 = vmatpush1.bf16.msra.mxu0 0
    %76 = vmatprep.subr.bf16.mxu0 0
    %77 = vmatpush1.bf16.msra.mxu0 0
    %78 = vmatprep.subr.bf16.mxu0 0
    %79 = vmatpush1.bf16.msra.mxu0 0
    %80 = vmatprep.subr.bf16.mxu0 0
    %81 = vmatpush1.bf16.msra.mxu0 0
    %82 = vmatprep.subr.bf16.mxu0 0
    %83 = vmatpush1.bf16.msra.mxu0 0
    %84 = vmatprep.subr.bf16.mxu0 0
    %85 = vmatpush1.bf16.msra.mxu0 0
    %86 = vmatprep.subr.bf16.mxu0 0
    %87 = vmatpush1.bf16.msra.mxu0 0
    %88 = vmatprep.mubr.bf16.mxu0 0
    %89 = vmatmul.mubr.bf16.gmra.mrb[0].mxu0 %v54
    %v90 = vpop.f32.mrb[0].mxu0
    %v91 = vadd.f32 %v38, %v90
    %v92 = vpop.f32.mrb[0].mxu0
    %v93 = vpop.f32.mrb[0].mxu0
    %v94 = vpop.f32.mrb[0].mxu0
    %95 = vdwg.mxu0
    %v96 = vmax.f32 %v91, 0.0
    %v97 = vpack.c.bf16 %v96, %v96
    %v98 = vld [vmem:[%s3] sm:$0xf]
    %v99 = vld [vmem:[%s3 + $0x4] sm:$0xf]
    %v100 = vld [vmem:[%s3 + $0x8] sm:$0xf]
    %v101 = vld [vmem:[%s3 + $0xc] sm:$0xf]
    %v102 = vld [vmem:[%s3 + $0x10] sm:$0xf]
    %v103 = vld [vmem:[%s3 + $0x14] sm:$0xf]
    %v104 = vld [vmem:[%s3 + $0x18] sm:$0xf]
    %v105 = vld [vmem:[%s3 + $0x1c] sm:$0xf]
    %v106 = vld [vmem:[%s3 + $0x20] sm:$0xf]
    %v107 = vld [vmem:[%s3 + $0x24] sm:$0xf]
    %v108 = vld [vmem:[%s3 + $0x28] sm:$0xf]
    %v109 = vld [vmem:[%s3 + $0x2c] sm:$0xf]
    %v110 = vld [vmem:[%s3 + $0x30] sm:$0xf]
    %v111 = vld [vmem:[%s3 + $0x34] sm:$0xf]
    %v112 = vld [vmem:[%s3 + $0x38] sm:$0xf]
    %v113 = vld [vmem:[%s3 + $0x3c] sm:$0xf]
    %v114 = vld [vmem:[%s4] sm:$0x1]
    %v116 = vlaneseq
    %v117 = vshrl.u32 %v116, 7
    %v118 = vsub.s32 0, %v117
    %v119 = vrot.slane %v114, %v118
    %v137 = vunpack.c.l.b16 %v98
    %v138 = vunpack.c.l.b16 %v99
    %v139 = vunpack.c.l.b16 %v100
    %v140 = vunpack.c.l.b16 %v101
    %v141 = vunpack.c.l.b16 %v102
    %v142 = vunpack.c.l.b16 %v103
    %v143 = vunpack.c.l.b16 %v104
    %v144 = vunpack.c.l.b16 %v105
    %v145 = vunpack.c.l.b16 %v106
    %v146 = vunpack.c.l.b16 %v107
    %v147 = vunpack.c.l.b16 %v108
    %v148 = vunpack.c.l.b16 %v109
    %v149 = vunpack.c.l.b16 %v110
    %v150 = vunpack.c.l.b16 %v111
    %v151 = vunpack.c.l.b16 %v112
    %v152 = vunpack.c.l.b16 %v113
    %v153 = vpack.c.b16 %v138, %v137
    %v154 = vpack.c.b16 %v140, %v139
    %v155 = vpack.c.b16 %v142, %v141
    %v156 = vpack.c.b16 %v144, %v143
    %v157 = vpack.c.b16 %v146, %v145
    %v158 = vpack.c.b16 %v148, %v147
    %v159 = vpack.c.b16 %v150, %v149
    %v160 = vpack.c.b16 %v152, %v151
    %169 = vmatprep.subr.bf16.mxu0 0
    %170 = vmatpush1.bf16.msra.mxu0 %v153
    %171 = vmatprep.subr.bf16.mxu0 0
    %172 = vmatpush1.bf16.msra.mxu0 %v154
    %173 = vmatprep.subr.bf16.mxu0 0
    %174 = vmatpush1.bf16.msra.mxu0 %v155
    %175 = vmatprep.subr.bf16.mxu0 0
    %176 = vmatpush1.bf16.msra.mxu0 %v156
    %177 = vmatprep.subr.bf16.mxu0 0
    %178 = vmatpush1.bf16.msra.mxu0 %v157
    %179 = vmatprep.subr.bf16.mxu0 0
    %180 = vmatpush1.bf16.msra.mxu0 %v158
    %181 = vmatprep.subr.bf16.mxu0 0
    %182 = vmatpush1.bf16.msra.mxu0 %v159
    %183 = vmatprep.subr.bf16.mxu0 0
    %184 = vmatpush1.bf16.msra.mxu0 %v160
    %185 = vmatprep.subr.bf16.mxu0 0
    %186 = vmatpush1.bf16.msra.mxu0 0
    %187 = vmatprep.subr.bf16.mxu0 0
    %188 = vmatpush1.bf16.msra.mxu0 0
    %189 = vmatprep.subr.bf16.mxu0 0
    %190 = vmatpush1.bf16.msra.mxu0 0
    %191 = vmatprep.subr.bf16.mxu0 0
    %192 = vmatpush1.bf16.msra.mxu0 0
    %193 = vmatprep.subr.bf16.mxu0 0
    %194 = vmatpush1.bf16.msra.mxu0 0
    %195 = vmatprep.subr.bf16.mxu0 0
    %196 = vmatpush1.bf16.msra.mxu0 0
    %197 = vmatprep.subr.bf16.mxu0 0
    %198 = vmatpush1.bf16.msra.mxu0 0
    %199 = vmatprep.subr.bf16.mxu0 0
    %200 = vmatpush1.bf16.msra.mxu0 0
    %201 = vmatprep.mubr.bf16.mxu0 0
    %202 = vmatmul.mubr.bf16.gmra.mrb[0].mxu0 %v97
    %v203 = vpop.f32.mrb[0].mxu0
    %v204 = vadd.f32 %v119, %v203
    %v205 = vpop.f32.mrb[0].mxu0
    %v206 = vpop.f32.mrb[0].mxu0
    %v207 = vpop.f32.mrb[0].mxu0
    %208 = vdwg.mxu0
    %v209 = vmax.f32 %v204, 0.0
    %v210 = vld [vmem:[%s5] sm:$0xff]
    %v211 = vld [vmem:[%s5 + $0x8] sm:$0xff]
    %v212 = vld [vmem:[%s5 + $0x10] sm:$0xff]
    %v213 = vld [vmem:[%s5 + $0x18] sm:$0xff]
    %v214 = vld [vmem:[%s5 + $0x20] sm:$0xff]
    %v215 = vld [vmem:[%s5 + $0x28] sm:$0xff]
    %v216 = vld [vmem:[%s5 + $0x30] sm:$0xff]
    %v217 = vld [vmem:[%s5 + $0x38] sm:$0xff]
    %v218 = vld [vmem:[%s5 + $0x40] sm:$0xff]
    %v219 = vld [vmem:[%s5 + $0x48] sm:$0xff]
    %v220 = vld [vmem:[%s5 + $0x50] sm:$0xff]
    %v221 = vld [vmem:[%s5 + $0x58] sm:$0xff]
    %v222 = vld [vmem:[%s5 + $0x60] sm:$0xff]
    %v223 = vld [vmem:[%s5 + $0x68] sm:$0xff]
    %v224 = vld [vmem:[%s5 + $0x70] sm:$0xff]
    %v225 = vld [vmem:[%s5 + $0x78] sm:$0xff]
    %v226 = vld [vmem:[%s6] sm:$0x1]
    %v228 = vlaneseq
    %v229 = vshrl.u32 %v228, 7
    %v230 = vsub.s32 0, %v229
    %v231 = vrot.slane %v226, %v230
    %233 = vmatprep.subr.mxu0 0.0
    %234 = vmatpush1.msra.mxu0 %v210
    %235 = vmatprep.subr.mxu0 0.0
    %236 = vmatpush1.msra.mxu0 %v211
    %237 = vmatprep.subr.mxu0 0.0
    %238 = vmatpush1.msra.mxu0 %v212
    %239 = vmatprep.subr.mxu0 0.0
    %240 = vmatpush1.msra.mxu0 %v213
    %241 = vmatprep.subr.mxu0 0.0
    %242 = vmatpush1.msra.mxu0 %v214
    %243 = vmatprep.subr.mxu0 0.0
    %244 = vmatpush1.msra.mxu0 %v215
    %245 = vmatprep.subr.mxu0 0.0
    %246 = vmatpush1.msra.mxu0 %v216
    %247 = vmatprep.subr.mxu0 0.0
    %248 = vmatpush1.msra.mxu0 %v217
    %249 = vmatprep.subr.mxu0 0.0
    %250 = vmatpush1.msra.mxu0 %v218
    %251 = vmatprep.subr.mxu0 0.0
    %252 = vmatpush1.msra.mxu0 %v219
    %253 = vmatprep.subr.mxu0 0.0
    %254 = vmatpush1.msra.mxu0 %v220
    %255 = vmatprep.subr.mxu0 0.0
    %256 = vmatpush1.msra.mxu0 %v221
    %257 = vmatprep.subr.mxu0 0.0
    %258 = vmatpush1.msra.mxu0 %v222
    %259 = vmatprep.subr.mxu0 0.0
    %260 = vmatpush1.msra.mxu0 %v223
    %261 = vmatprep.subr.mxu0 0.0
    %262 = vmatpush1.msra.mxu0 %v224
    %263 = vmatprep.subr.mxu0 0.0
    %264 = vmatpush1.msra.mxu0 %v225
    %265 = vmatprep.subr.mxu0 0.0
    %266 = vmatpush1.msra.mxu0 0.0
    %267 = vmatprep.subr.mxu0 0.0
    %268 = vmatpush1.msra.mxu0 0.0
    %269 = vmatprep.subr.mxu0 0.0
    %270 = vmatpush1.msra.mxu0 0.0
    %271 = vmatprep.subr.mxu0 0.0
    %272 = vmatpush1.msra.mxu0 0.0
    %273 = vmatprep.subr.mxu0 0.0
    %274 = vmatpush1.msra.mxu0 0.0
    %275 = vmatprep.subr.mxu0 0.0
    %276 = vmatpush1.msra.mxu0 0.0
    %277 = vmatprep.subr.mxu0 0.0
    %278 = vmatpush1.msra.mxu0 0.0
    %279 = vmatprep.subr.mxu0 0.0
    %280 = vmatpush1.msra.mxu0 0.0
    %281 = vmatprep.subr.mxu0 0.0
    %282 = vmatpush1.msra.mxu0 0.0
    %283 = vmatprep.subr.mxu0 0.0
    %284 = vmatpush1.msra.mxu0 0.0
    %285 = vmatprep.subr.mxu0 0.0
    %286 = vmatpush1.msra.mxu0 0.0
    %287 = vmatprep.subr.mxu0 0.0
    %288 = vmatpush1.msra.mxu0 0.0
    %289 = vmatprep.subr.mxu0 0.0
    %290 = vmatpush1.msra.mxu0 0.0
    %291 = vmatprep.subr.mxu0 0.0
    %292 = vmatpush1.msra.mxu0 0.0
    %293 = vmatprep.subr.mxu0 0.0
    %294 = vmatpush1.msra.mxu0 0.0
    %295 = vmatprep.subr.mxu0 0.0
    %296 = vmatpush1.msra.mxu0 0.0
    %297 = vmatprep.mubr.f32.mxu0 0.0
    %298 = vmatmul.mubr.f32.gmra.mrb[0].mxu0 %v209
    %v299 = vpop.f32.mrb[0].mxu0
    %v300 = vadd.f32 %v231, %v299
    %v301 = vpop.f32.mrb[0].mxu0
    %302 = vdwg.mxu0
    %v303 = vpack.c.bf16 %v300, %v300
    %vm304 = vcmask 257024
    %305 = vst.msk [vmem:[#allocation2] sm:$0xf] %vm304, %v303
    // Predicated region
    $region30: #{tpu_custom_call.1} parent=1 // pred_check
      _
    $region31: #{tpu_custom_call.1} parent=1 // pred_check_branch
      %307 = sbr.rel (0) target = $region33
    $region32: #{tpu_custom_call.1} parent=1 // pred_region
      %s309 = ssub.s32 64, 64
      %310 = vsyncadd [#allocation3], %s309
      %s312 = sshll.u32 [#allocation2], 4
      %s313 = int_to_ptr.vmem [resolvable:$true] %s312
      %315 = dma.vmem_to_hbm [thread:$0]  %s313, 64, %s7, [#allocation3]
    $region33: #{tpu_custom_call.1} parent=1 // pred_fallthru
      _
    // Predicated region
    $region34: #{tpu_custom_call.1} parent=1 // pred_check
      _
    $region35: #{tpu_custom_call.1} parent=1 // pred_check_branch
      %317 = sbr.rel (0) target = $region37
    $region36: #{tpu_custom_call.1} parent=1 // pred_region
      %318 = dma.done [#allocation3], 64
    $region37: #{tpu_custom_call.1} parent=1 // pred_fallthru
      _
    %319 = vsyncpa [#allocation3], 1

</llo_original>
